<compile_context>
chip_gen: v5e
topology: v5e:2x2
jax: 0.10.0
libtpu: 0.0.40
codegen_flags: <defaults>
</compile_context>

<pallas_src>
import functools
import itertools

import numpy as np

import jax
import jax.numpy as jnp
from jax import lax
from jax.experimental import pallas as pl
from jax.experimental.pallas import tpu as pltpu


def _build_assignments(M: int) -> np.ndarray:
    """All assignments A in {0,1}^{2xM} with exactly one 1 per column, excluding
    the two that leave a mixture group empty.  Returns the mixture-0 rows as a
    [K_pad, M] float32 matrix (mixture-1 rows are 1 - A0).  K is padded up to a
    multiple of 8 with copies of the first valid assignment (duplicates do not
    change the min over assignments)."""
    rows0 = []
    for assign in itertools.product([0, 1], repeat=M):
        s = sum(assign)
        if s == 0 or s == M:
            continue
        rows0.append(np.array([1.0 if v == 0 else 0.0 for v in assign],
                              dtype=np.float32))
    A0 = np.stack(rows0, axis=0)                       # [K, M]
    K = A0.shape[0]
    K_pad = ((K + 7) // 8) * 8
    if K_pad > K:
        A0 = np.concatenate([A0, np.repeat(A0[:1], K_pad - K, axis=0)], axis=0)
    return A0


def _mixit_kernel(est_ref, mix_ref, a0_ref, out_ref,
                  g_acc, c_acc, ee_acc, *, tau, t_rem):
    t = pl.program_id(1)
    nt = pl.num_programs(1)

    s = est_ref[0]          # [M, Tt], native dtype (bf16 feeds the MXU directly)
    x = mix_ref[0]          # [2, Tt]

    if t_rem > 0:
        # The last time tile is partial: lanes >= t_rem hold undefined data and
        # must be zeroed before they reach the Gram / cross-correlation dots.
        t_tile = s.shape[-1]
        limit = jnp.where(t == nt - 1, t_rem, t_tile)
        s = jnp.where(lax.broadcasted_iota(jnp.int32, s.shape, 1) < limit,
                      s, jnp.zeros_like(s))
        x = jnp.where(lax.broadcasted_iota(jnp.int32, x.shape, 1) < limit,
                      x, jnp.zeros_like(x))

    # Contract over the time (lane) axis on the MXU: lhs @ rhs^T, f32 accumulate.
    dn = (((1,), (1,)), ((), ()))
    g_part = lax.dot_general(s, s, dn, preferred_element_type=jnp.float32)    # [M, M]
    c_part = lax.dot_general(x, s, dn, preferred_element_type=jnp.float32)    # [2, M]
    ee_part = lax.dot_general(x, x, dn, preferred_element_type=jnp.float32)   # [2, 2]

    @pl.when(t == 0)
    def _init():
        g_acc[...] = jnp.zeros_like(g_acc)
        c_acc[...] = jnp.zeros_like(c_acc)
        ee_acc[...] = jnp.zeros_like(ee_acc)

    g_acc[...] += g_part
    c_acc[...] += c_part
    ee_acc[...] += ee_part

    @pl.when(t == nt - 1)
    def _finalize():
        G = g_acc[...]                   # [M, M]
        c = c_acc[...]                   # [2, M]
        ee = ee_acc[...]                 # [2, 2]
        A0 = a0_ref[...]                 # [Kp, M] float32
        A1 = 1.0 - A0                    # [Kp, M]

        e0 = ee[0:1, 0:1]                # [1, 1]  sum(x0^2)
        e1 = ee[1:2, 1:2]                # [1, 1]  sum(x1^2)

        # residual ||x_i - A_i @ S||^2 = e_i - 2*(A_i . c_i) + diag(A_i G A_i^T)
        quad0 = jnp.sum(jnp.dot(A0, G, preferred_element_type=jnp.float32) * A0,
                        axis=-1, keepdims=True)                     # [Kp, 1]
        quad1 = jnp.sum(jnp.dot(A1, G, preferred_element_type=jnp.float32) * A1,
                        axis=-1, keepdims=True)                     # [Kp, 1]
        cross0 = jnp.sum(A0 * c[0:1, :], axis=-1, keepdims=True)    # [Kp, 1]
        cross1 = jnp.sum(A1 * c[1:2, :], axis=-1, keepdims=True)    # [Kp, 1]

        # Clamp against catastrophic cancellation (residual << energy in f32).
        n0 = jnp.maximum(e0 - 2.0 * cross0 + quad0, 0.0)            # [Kp, 1]
        n1 = jnp.maximum(e1 - 2.0 * cross1 + quad1, 0.0)            # [Kp, 1]

        # snr0 + snr1 = 10*log10((n0+tau*e0)*(n1+tau*e1)) - 10*log10(e0*e1).
        # log10 is monotone, so take the min over assignments of its argument
        # first: the epilogue then needs only two transcendentals total.
        prod = (n0 + tau * e0) * (n1 + tau * e1)                    # [Kp, 1]
        best = jnp.min(prod)
        denom = jnp.max(e0 * e1)
        min_loss = 10.0 * (jnp.log10(best) - jnp.log10(denom))
        out_ref[...] = jnp.full(out_ref.shape, min_loss, dtype=out_ref.dtype)


def _pick_tiling(T, itemsize, t_tile):
    """Pick the time tile and scoped-VMEM limit from the chip's VMEM capacity."""
    try:
        vmem_cap = int(pltpu.get_tpu_info().vmem_capacity_bytes)
    except Exception:
        vmem_cap = 64 << 20          # conservative fallback (v7x per-TensorCore)
    if t_tile is None:
        # Two double-buffered input streams, each padded to 8 sublanes in VMEM.
        budget = vmem_cap // 4
        t_tile = budget // (2 * 2 * 8 * itemsize)
        t_tile = max(1024, min(128 * 1024, (t_tile // 128) * 128))
    if T <= t_tile:
        t_tile = T                   # whole time axis in a single tile
    input_vmem = 2 * 2 * 8 * t_tile * itemsize
    vmem_limit = int(min(vmem_cap, max(32 << 20, input_vmem + (8 << 20))))
    return int(t_tile), vmem_limit


def mixit_loss(estimated_sources: jax.Array,
               input_mixtures: jax.Array,
               tau: float = 1e-6,
               t_tile=None) -> jax.Array:
    """Pallas implementation of MixIT_Loss.forward (returns scalar mean loss)."""
    B, M, T = estimated_sources.shape
    _, J, _ = input_mixtures.shape
    assert J == 2, f"input_mixtures second dim must be 2, got {J}"
    assert M >= 2, "need at least two estimated sources"

    A0 = jnp.asarray(_build_assignments(M))            # [Kp, M] float32
    Kp = A0.shape[0]

    itemsize = max(jnp.dtype(estimated_sources.dtype).itemsize,
                   jnp.dtype(input_mixtures.dtype).itemsize)
    t_tile, vmem_limit = _pick_tiling(T, itemsize, t_tile)
    if t_tile < T:
        assert t_tile % 128 == 0, "time tile must be a multiple of 128 lanes"
    n_t = pl.cdiv(T, t_tile)
    t_rem = T % t_tile                                   # 0 => no tail masking

    kernel = functools.partial(_mixit_kernel, tau=float(tau), t_rem=int(t_rem))

    out = pl.pallas_call(
        kernel,
        out_shape=jax.ShapeDtypeStruct((B, 8, 128), jnp.float32),
        grid=(B, n_t),
        in_specs=[
            pl.BlockSpec((1, M, t_tile), lambda b, t: (b, 0, t)),   # sources tile
            pl.BlockSpec((1, 2, t_tile), lambda b, t: (b, 0, t)),   # mixtures tile
            pl.BlockSpec((Kp, M), lambda b, t: (0, 0)),             # assignments (mix-0 rows)
        ],
        out_specs=pl.BlockSpec((1, 8, 128), lambda b, t: (b, 0, 0)),
        scratch_shapes=[
            pltpu.VMEM((M, M), jnp.float32),   # G  = S S^T accumulator
            pltpu.VMEM((2, M), jnp.float32),   # c  = X S^T accumulator
            pltpu.VMEM((2, 2), jnp.float32),   # ee = X X^T accumulator (energies on diag)
        ],
        compiler_params=pltpu.CompilerParams(
            dimension_semantics=("parallel", "arbitrary"),
            vmem_limit_bytes=vmem_limit),
    )(estimated_sources, input_mixtures, A0)

    per_batch = out[:, 0, 0]       # [B]
    return jnp.mean(per_batch)     # final .mean() over batch (plain JAX glue)


def mixit_loss_ref(est: np.ndarray, mix: np.ndarray, tau: float = 1e-6) -> float:
    """Pure-numpy reference matching the PyTorch module semantics."""
    est = np.asarray(est, dtype=np.float64)
    mix = np.asarray(mix, dtype=np.float64)
    B, M, T = est.shape
    mats = []
    for assign in itertools.product([0, 1], repeat=M):
        s = sum(assign)
        if s == 0 or s == M:
            continue
        A = np.zeros((2, M), dtype=np.float64)
        for i, v in enumerate(assign):
            A[v, i] = 1.0
        mats.append(A)
    losses = np.full((B,), np.inf)
    for b in range(B):
        for A in mats:
            est_mix = A @ est[b]
            total = 0.0
            for i in range(2):
                e = np.sum(mix[b, i] ** 2)
                n = np.sum((mix[b, i] - est_mix[i]) ** 2)
                total += -10.0 * np.log10(e / (n + tau * e))
            losses[b] = min(losses[b], total)
    return float(losses.mean())


if __name__ == "__main__":
    B, M, T = 2, 4, 256
    key = jax.random.PRNGKey(0)
    k1, k2, k3, k4 = jax.random.split(key, 4)

    sources = jax.random.normal(k1, (B, M, T), dtype=jnp.float32)
    # Mixtures are sums of disjoint source groups + small noise so the optimal
    # assignment is well defined.
    mix0 = sources[:, :2, :].sum(axis=1)
    mix1 = sources[:, 2:, :].sum(axis=1)
    mixtures = jnp.stack([mix0, mix1], axis=1) \
        + 0.1 * jax.random.normal(k2, (B, 2, T), dtype=jnp.float32)

    ref = mixit_loss_ref(np.asarray(sources), np.asarray(mixtures), tau=1e-6)

    # 1) Single-tile path (whole T in one lane tile).
    loss = jax.block_until_ready(mixit_loss(sources, mixtures, tau=1e-6))
    assert np.isfinite(float(loss)), "kernel produced non-finite loss"
    np.testing.assert_allclose(float(loss), ref, rtol=2e-3, atol=1e-3)

    # 2) Multi-tile path with a partial tail tile (reduction axis + tail masking).
    T2 = 200
    sources2 = jax.random.normal(k3, (B, M, T2), dtype=jnp.float32)
    mix0_2 = sources2[:, :2, :].sum(axis=1)
    mix1_2 = sources2[:, 2:, :].sum(axis=1)
    mixtures2 = jnp.stack([mix0_2, mix1_2], axis=1) \
        + 0.1 * jax.random.normal(k4, (B, 2, T2), dtype=jnp.float32)
    ref2 = mixit_loss_ref(np.asarray(sources2), np.asarray(mixtures2), tau=1e-6)
    loss2 = jax.block_until_ready(
        mixit_loss(sources2, mixtures2, tau=1e-6, t_tile=128))
    np.testing.assert_allclose(float(loss2), ref2, rtol=2e-3, atol=1e-3)

    # 3) bf16 inputs feed the MXU natively (f32 accumulate) — smoke check.
    loss_bf16 = jax.block_until_ready(
        mixit_loss(sources.astype(jnp.bfloat16),
                   mixtures.astype(jnp.bfloat16), tau=1e-6))
    assert np.isfinite(float(loss_bf16)), "bf16 path produced non-finite loss"

    print("KERNEL_OK")
</pallas_src>

<mosaic_0001>
module attributes {stable_mosaic.version = 11 : i64} {
  func.func @_mixit_kernel(%arg0: i32, %arg1: i32, %arg2: memref<1x4x256xf32, #tpu.memory_space<vmem>>, %arg3: memref<1x2x256xf32, #tpu.memory_space<vmem>>, %arg4: memref<16x4xf32, #tpu.memory_space<vmem>>, %arg5: memref<1x8x128xf32, #tpu.memory_space<vmem>>, %arg6: memref<4x4xf32, #tpu.memory_space<vmem>>, %arg7: memref<2x4xf32, #tpu.memory_space<vmem>>, %arg8: memref<2x2xf32, #tpu.memory_space<vmem>>) attributes {dimension_semantics = [#tpu.dimension_semantics<parallel>, #tpu.dimension_semantics<arbitrary>], iteration_bounds = array<i64: 2, 1>, scalar_prefetch = 0 : i64, scratch_operands = 3 : i64, tpu.core_type = #tpu.core_type<tc>, window_params = [{transform_indices = @transform_0, window_bounds = array<i64: 1, 4, 256>}, {transform_indices = @transform_1, window_bounds = array<i64: 1, 2, 256>}, {pipeline_mode = #tpu.pipeline_mode<synchronous>, transform_indices = @transform_2, window_bounds = array<i64: 16, 4>}, {transform_indices = @transform_3, window_bounds = array<i64: 1, 8, 128>}]} {
    %c0 = arith.constant 0 : index
    %c0_0 = arith.constant 0 : index
    %c0_1 = arith.constant 0 : index
    %0 = vector.load %arg2[%c0, %c0_0, %c0_1] : memref<1x4x256xf32, #tpu.memory_space<vmem>>, vector<1x4x256xf32>
    %1 = vector.shape_cast %0 : vector<1x4x256xf32> to vector<4x256xf32>
    %c0_2 = arith.constant 0 : index
    %c0_3 = arith.constant 0 : index
    %c0_4 = arith.constant 0 : index
    %2 = vector.load %arg3[%c0_2, %c0_3, %c0_4] : memref<1x2x256xf32, #tpu.memory_space<vmem>>, vector<1x2x256xf32>
    %3 = vector.shape_cast %2 : vector<1x2x256xf32> to vector<2x256xf32>
    %cst = arith.constant dense<0.000000e+00> : vector<4x4xf32>
    %4 = tpu.matmul %1, %1, %cst {dimension_numbers = #tpu.dot_dimension_numbers<[1], [1], [0], [0], [0, 0, 1, 0], [], []>} : vector<4x256xf32>, vector<4x256xf32>, vector<4x4xf32> -> vector<4x4xf32>
    %cst_5 = arith.constant dense<0.000000e+00> : vector<2x4xf32>
    %5 = tpu.matmul %3, %1, %cst_5 {dimension_numbers = #tpu.dot_dimension_numbers<[1], [1], [0], [0], [0, 0, 1, 0], [], []>} : vector<2x256xf32>, vector<4x256xf32>, vector<2x4xf32> -> vector<2x4xf32>
    %cst_6 = arith.constant dense<0.000000e+00> : vector<2x2xf32>
    %6 = tpu.matmul %3, %3, %cst_6 {dimension_numbers = #tpu.dot_dimension_numbers<[1], [1], [0], [0], [0, 0, 1, 0], [], []>} : vector<2x256xf32>, vector<2x256xf32>, vector<2x2xf32> -> vector<2x2xf32>
    %c0_i32 = arith.constant 0 : i32
    %7 = arith.cmpi eq, %arg1, %c0_i32 : i32
    %8 = arith.extui %7 : i1 to i32
    %c0_i32_7 = arith.constant 0 : i32
    %9 = arith.cmpi ne, %8, %c0_i32_7 : i32
    scf.if %9 {
      %cst_22 = arith.constant 0.000000e+00 : f32
      %22 = vector.broadcast %cst_22 : f32 to vector<4x4xf32>
      %c0_23 = arith.constant 0 : index
      %c0_24 = arith.constant 0 : index
      %23 = vector.load %arg6[%c0_23, %c0_24] : memref<4x4xf32, #tpu.memory_space<vmem>>, vector<4x4xf32>
      tpu.vector_store %arg6[%c0_23, %c0_24], %22 {strides = array<i32>} : memref<4x4xf32, #tpu.memory_space<vmem>>, vector<4x4xf32>,
      %cst_25 = arith.constant 0.000000e+00 : f32
      %24 = vector.broadcast %cst_25 : f32 to vector<2x4xf32>
      %c0_26 = arith.constant 0 : index
      %c0_27 = arith.constant 0 : index
      %25 = vector.load %arg7[%c0_26, %c0_27] : memref<2x4xf32, #tpu.memory_space<vmem>>, vector<2x4xf32>
      tpu.vector_store %arg7[%c0_26, %c0_27], %24 {strides = array<i32>} : memref<2x4xf32, #tpu.memory_space<vmem>>, vector<2x4xf32>,
      %cst_28 = arith.constant 0.000000e+00 : f32
      %26 = vector.broadcast %cst_28 : f32 to vector<2x2xf32>
      %c0_29 = arith.constant 0 : index
      %c0_30 = arith.constant 0 : index
      %27 = vector.load %arg8[%c0_29, %c0_30] : memref<2x2xf32, #tpu.memory_space<vmem>>, vector<2x2xf32>
      tpu.vector_store %arg8[%c0_29, %c0_30], %26 {strides = array<i32>} : memref<2x2xf32, #tpu.memory_space<vmem>>, vector<2x2xf32>,
    } else {
    }
    %c0_8 = arith.constant 0 : index
    %c0_9 = arith.constant 0 : index
    %10 = vector.load %arg6[%c0_8, %c0_9] : memref<4x4xf32, #tpu.memory_space<vmem>>, vector<4x4xf32>
    %11 = arith.addf %10, %4 : vector<4x4xf32>
    %c0_10 = arith.constant 0 : index
    %c0_11 = arith.constant 0 : index
    %12 = vector.load %arg6[%c0_10, %c0_11] : memref<4x4xf32, #tpu.memory_space<vmem>>, vector<4x4xf32>
    tpu.vector_store %arg6[%c0_10, %c0_11], %11 {strides = array<i32>} : memref<4x4xf32, #tpu.memory_space<vmem>>, vector<4x4xf32>,
    %c0_12 = arith.constant 0 : index
    %c0_13 = arith.constant 0 : index
    %13 = vector.load %arg7[%c0_12, %c0_13] : memref<2x4xf32, #tpu.memory_space<vmem>>, vector<2x4xf32>
    %14 = arith.addf %13, %5 : vector<2x4xf32>
    %c0_14 = arith.constant 0 : index
    %c0_15 = arith.constant 0 : index
    %15 = vector.load %arg7[%c0_14, %c0_15] : memref<2x4xf32, #tpu.memory_space<vmem>>, vector<2x4xf32>
    tpu.vector_store %arg7[%c0_14, %c0_15], %14 {strides = array<i32>} : memref<2x4xf32, #tpu.memory_space<vmem>>, vector<2x4xf32>,
    %c0_16 = arith.constant 0 : index
    %c0_17 = arith.constant 0 : index
    %16 = vector.load %arg8[%c0_16, %c0_17] : memref<2x2xf32, #tpu.memory_space<vmem>>, vector<2x2xf32>
    %17 = arith.addf %16, %6 : vector<2x2xf32>
    %c0_18 = arith.constant 0 : index
    %c0_19 = arith.constant 0 : index
    %18 = vector.load %arg8[%c0_18, %c0_19] : memref<2x2xf32, #tpu.memory_space<vmem>>, vector<2x2xf32>
    tpu.vector_store %arg8[%c0_18, %c0_19], %17 {strides = array<i32>} : memref<2x2xf32, #tpu.memory_space<vmem>>, vector<2x2xf32>,
    %c0_i32_20 = arith.constant 0 : i32
    %19 = arith.cmpi eq, %arg1, %c0_i32_20 : i32
    %20 = arith.extui %19 : i1 to i32
    %c0_i32_21 = arith.constant 0 : i32
    %21 = arith.cmpi ne, %20, %c0_i32_21 : i32
    scf.if %21 {
      %c0_22 = arith.constant 0 : index
      %c0_23 = arith.constant 0 : index
      %22 = vector.load %arg6[%c0_22, %c0_23] : memref<4x4xf32, #tpu.memory_space<vmem>>, vector<4x4xf32>
      %c0_24 = arith.constant 0 : index
      %c0_25 = arith.constant 0 : index
      %23 = vector.load %arg7[%c0_24, %c0_25] : memref<2x4xf32, #tpu.memory_space<vmem>>, vector<2x4xf32>
      %c0_26 = arith.constant 0 : index
      %c0_27 = arith.constant 0 : index
      %24 = vector.load %arg8[%c0_26, %c0_27] : memref<2x2xf32, #tpu.memory_space<vmem>>, vector<2x2xf32>
      %c0_28 = arith.constant 0 : index
      %c0_29 = arith.constant 0 : index
      %25 = vector.load %arg4[%c0_28, %c0_29] : memref<16x4xf32, #tpu.memory_space<vmem>>, vector<16x4xf32>
      %cst_30 = arith.constant 1.000000e+00 : f32
      %26 = vector.broadcast %cst_30 : f32 to vector<16x4xf32>
      %27 = arith.subf %26, %25 : vector<16x4xf32>
      %28 = vector.extract_strided_slice %24 {offsets = [0, 0], sizes = [1, 1], strides = [1, 1]} : vector<2x2xf32> to vector<1x1xf32>
      %29 = vector.extract_strided_slice %24 {offsets = [1, 1], sizes = [1, 1], strides = [1, 1]} : vector<2x2xf32> to vector<1x1xf32>
      %cst_31 = arith.constant dense<0.000000e+00> : vector<16x4xf32>
      %30 = tpu.matmul %25, %22, %cst_31 {dimension_numbers = #tpu.dot_dimension_numbers<[1], [0], [0], [1], [0, 0, 1, 1], [], []>} : vector<16x4xf32>, vector<4x4xf32>, vector<16x4xf32> -> vector<16x4xf32>
      %31 = arith.mulf %30, %25 : vector<16x4xf32>
      %cst_32 = arith.constant dense<0.000000e+00> : vector<16xf32>
      %32 = vector.multi_reduction <add>, %31, %cst_32 [1] : vector<16x4xf32> to vector<16xf32>
      %33 = vector.shape_cast %32 : vector<16xf32> to vector<16x1xf32>
      %cst_33 = arith.constant dense<0.000000e+00> : vector<16x4xf32>
      %34 = tpu.matmul %27, %22, %cst_33 {dimension_numbers = #tpu.dot_dimension_numbers<[1], [0], [0], [1], [0, 0, 1, 1], [], []>} : vector<16x4xf32>, vector<4x4xf32>, vector<16x4xf32> -> vector<16x4xf32>
      %35 = arith.mulf %34, %27 : vector<16x4xf32>
      %cst_34 = arith.constant dense<0.000000e+00> : vector<16xf32>
      %36 = vector.multi_reduction <add>, %35, %cst_34 [1] : vector<16x4xf32> to vector<16xf32>
      %37 = vector.shape_cast %36 : vector<16xf32> to vector<16x1xf32>
      %38 = vector.extract_strided_slice %23 {offsets = [0, 0], sizes = [1, 4], strides = [1, 1]} : vector<2x4xf32> to vector<1x4xf32>
      %39 = vector.broadcast %38 : vector<1x4xf32> to vector<16x4xf32>
      %40 = arith.mulf %25, %39 : vector<16x4xf32>
      %cst_35 = arith.constant dense<0.000000e+00> : vector<16xf32>
      %41 = vector.multi_reduction <add>, %40, %cst_35 [1] : vector<16x4xf32> to vector<16xf32>
      %42 = vector.shape_cast %41 : vector<16xf32> to vector<16x1xf32>
      %43 = vector.extract_strided_slice %23 {offsets = [1, 0], sizes = [1, 4], strides = [1, 1]} : vector<2x4xf32> to vector<1x4xf32>
      %44 = vector.broadcast %43 : vector<1x4xf32> to vector<16x4xf32>
      %45 = arith.mulf %27, %44 : vector<16x4xf32>
      %cst_36 = arith.constant dense<0.000000e+00> : vector<16xf32>
      %46 = vector.multi_reduction <add>, %45, %cst_36 [1] : vector<16x4xf32> to vector<16xf32>
      %47 = vector.shape_cast %46 : vector<16xf32> to vector<16x1xf32>
      %cst_37 = arith.constant 2.000000e+00 : f32
      %48 = vector.broadcast %cst_37 : f32 to vector<16x1xf32>
      %49 = arith.mulf %48, %42 : vector<16x1xf32>
      %50 = vector.broadcast %28 : vector<1x1xf32> to vector<16x1xf32>
      %51 = arith.subf %50, %49 : vector<16x1xf32>
      %52 = arith.addf %51, %33 : vector<16x1xf32>
      %cst_38 = arith.constant 0.000000e+00 : f32
      %53 = vector.broadcast %cst_38 : f32 to vector<16x1xf32>
      %54 = arith.maximumf %52, %53 : vector<16x1xf32>
      %cst_39 = arith.constant 2.000000e+00 : f32
      %55 = vector.broadcast %cst_39 : f32 to vector<16x1xf32>
      %56 = arith.mulf %55, %47 : vector<16x1xf32>
      %57 = vector.broadcast %29 : vector<1x1xf32> to vector<16x1xf32>
      %58 = arith.subf %57, %56 : vector<16x1xf32>
      %59 = arith.addf %58, %37 : vector<16x1xf32>
      %cst_40 = arith.constant 0.000000e+00 : f32
      %60 = vector.broadcast %cst_40 : f32 to vector<16x1xf32>
      %61 = arith.maximumf %59, %60 : vector<16x1xf32>
      %cst_41 = arith.constant 9.99999997E-7 : f32
      %62 = vector.broadcast %cst_41 : f32 to vector<1x1xf32>
      %63 = arith.mulf %62, %28 : vector<1x1xf32>
      %64 = vector.broadcast %63 : vector<1x1xf32> to vector<16x1xf32>
      %65 = arith.addf %54, %64 : vector<16x1xf32>
      %cst_42 = arith.constant 9.99999997E-7 : f32
      %66 = vector.broadcast %cst_42 : f32 to vector<1x1xf32>
      %67 = arith.mulf %66, %29 : vector<1x1xf32>
      %68 = vector.broadcast %67 : vector<1x1xf32> to vector<16x1xf32>
      %69 = arith.addf %61, %68 : vector<16x1xf32>
      %70 = arith.mulf %65, %69 : vector<16x1xf32>
      %71 = vector.shape_cast %70 : vector<16x1xf32> to vector<1x16x1xf32>
      %cst_43 = arith.constant dense<0x7F800000> : vector<1xf32>
      %72 = vector.multi_reduction <minimumf>, %71, %cst_43 [1, 2] : vector<1x16x1xf32> to vector<1xf32>
      %73 = vector.shape_cast %72 : vector<1xf32> to vector<1x1x1xf32>
      %74 = vector.extract %73[0, 0, 0] : f32 from vector<1x1x1xf32>
      %75 = arith.mulf %28, %29 : vector<1x1xf32>
      %76 = vector.shape_cast %75 : vector<1x1xf32> to vector<1x1x1xf32>
      %cst_44 = arith.constant dense<0xFF800000> : vector<1xf32>
      %77 = vector.multi_reduction <maximumf>, %76, %cst_44 [1, 2] : vector<1x1x1xf32> to vector<1xf32>
      %78 = vector.shape_cast %77 : vector<1xf32> to vector<1x1x1xf32>
      %79 = vector.extract %78[0, 0, 0] : f32 from vector<1x1x1xf32>
      %80 = math.log %74 : f32
      %cst_45 = arith.constant 0.434294492 : f32
      %81 = arith.mulf %80, %cst_45 : f32
      %82 = math.log %79 : f32
      %cst_46 = arith.constant 0.434294492 : f32
      %83 = arith.mulf %82, %cst_46 : f32
      %84 = arith.subf %81, %83 : f32
      %cst_47 = arith.constant 1.000000e+01 : f32
      %85 = arith.mulf %cst_47, %84 : f32
      %86 = vector.broadcast %85 : f32 to vector<1x8x128xf32>
      %c0_48 = arith.constant 0 : index
      %c0_49 = arith.constant 0 : index
      %c0_50 = arith.constant 0 : index
      %87 = vector.load %arg5[%c0_48, %c0_49, %c0_50] : memref<1x8x128xf32, #tpu.memory_space<vmem>>, vector<1x8x128xf32>
      tpu.vector_store %arg5[%c0_48, %c0_49, %c0_50], %86 {strides = array<i32>} : memref<1x8x128xf32, #tpu.memory_space<vmem>>, vector<1x8x128xf32>,
    } else {
    }
    return
  }
  func.func @transform_0(%arg0: i32, %arg1: i32) -> (i32, i32, i32) {
    %c0_i32 = arith.constant 0 : i32
    %c0_i32_0 = arith.constant 0 : i32
    return %arg0, %c0_i32, %arg1 : i32, i32, i32
  }
  func.func @transform_1(%arg0: i32, %arg1: i32) -> (i32, i32, i32) {
    %c0_i32 = arith.constant 0 : i32
    %c0_i32_0 = arith.constant 0 : i32
    return %arg0, %c0_i32, %arg1 : i32, i32, i32
  }
  func.func @transform_2(%arg0: i32, %arg1: i32) -> (i32, i32) {
    %c0_i32 = arith.constant 0 : i32
    %c0_i32_0 = arith.constant 0 : i32
    %c0_i32_1 = arith.constant 0 : i32
    return %c0_i32, %c0_i32_0 : i32, i32
  }
  func.func @transform_3(%arg0: i32, %arg1: i32) -> (i32, i32, i32) {
    %c0_i32 = arith.constant 0 : i32
    %c0_i32_0 = arith.constant 0 : i32
    %c0_i32_1 = arith.constant 0 : i32
    return %arg0, %c0_i32, %c0_i32_0 : i32, i32, i32
  }
}

</mosaic_0001>

<llo_original>
// kernel: tpu_custom_call.1
$region0: #{tpu_custom_call.1}
  #allocation0 [shape = 'u32[]', space=smem, size = 0x4, offset = 0x4, fixed_abs, tag = 'smem constant byte address 0x4 - core index']
  #allocation1 [shape = 'u32[72,128]{1,0:T(1,128)}', space=vmem, size = 0x9000, scoped, tag = 'internal scratch']
  #allocation2 [shape = 'f32[4,4]{1,0:T(4,128)}', space=vmem, size = 0x800, scoped, tag = 'scratch operand']
  #allocation3 [shape = 'f32[2,4]{1,0:T(2,128)}', space=vmem, size = 0x400, scoped, tag = 'scratch operand']
  #allocation4 [shape = 'f32[2,2]{1,0:T(2,128)}', space=vmem, size = 0x400, scoped, tag = 'scratch operand']
  %s0 = inlined_call_operand.vmem [shape: f32[2,4,256], index: 0, kind: input, shape index: {}]
  %s1 = inlined_call_operand.hbm [shape: f32[2,2,256], index: 1, kind: input, shape index: {}]
  %s2 = inlined_call_operand.vmem [shape: f32[16,4], index: 2, kind: input, shape index: {}]
  %s3 = inlined_call_operand.hbm [shape: f32[2,8,128], index: 3, kind: output, shape index: {}]
  %s4 = sld [smem:[#allocation0]]
  $region57: #{tpu_custom_call.1} parent=0
    _
  %s6 = ssub.s32 1, %s4
  %s7 = scalar_select 0, %s6, %s4
  $region1: #{tpu_custom_call.1} parent=0
    #allocation5 [shape = 'u8[4096]{0}', space=vmem, size = 0x1000, scoped, tag = 'input window, operand 1']
    #allocation6 [shape = 's32[2]{0}', space=sflag, size = 0x8, scoped, tag = 'scoped memory for tpu_custom_call.1']
    #allocation7 [shape = 's32[2]{0}', space=sflag, size = 0x8, scoped, tag = 'scoped memory for tpu_custom_call.1']
    #allocation8 [shape = 'u8[8192]{0}', space=vmem, size = 0x2000, scoped, tag = 'output window, operand 0']
    %8 = vsyncpa [#allocation6], 0
    %s9 = scalar_lea.sflag [#allocation6], 1
    %10 = vsyncpa %s9, 0
    %11 = vsyncpa [#allocation7], 0
    %s12 = scalar_lea.sflag [#allocation7], 1
    %13 = vsyncpa %s12, 0
    loop: start=0, step=1, limit=4
    $region2: #{tpu_custom_call.1} parent=1 // loop_pre_header
      _
    $region3: #{tpu_custom_call.1} parent=1 // loop_header
      %s15 = sphi 0, %s19
      %p16 = scmp.ge.s32.totalorder %s15, 4
      %s22 = sphi 0, %s34
      %s23 = sphi 0, %s30
      %s24 = sphi 0, %s22
      %s25 = sphi 0, %s23
      %s26 = sphi 0, %s24
      %s27 = sphi 0, %s25
      %s39 = sphi 0, %s41
      %s42 = sphi 0, %s39
      %s43 = sphi 0, %s42
      %s59 = sphi 0, %s43
      %s67 = sphi 0, %s69
      %s70 = sphi 0, %s67
      %s71 = sphi 0, %s70
      %s87 = sphi 0, %s71
      %s91 = sphi 0, %s91
      %s93 = sphi 0, %s91
      %s94 = sphi 0, %s93
      %s108 = sphi 0, %s94
      %s114 = sphi 0, %s116
      %s117 = sphi 0, %s114
      %s118 = sphi 0, %s117
      %s134 = sphi 0, %s118
    $region4: #{tpu_custom_call.1} parent=1 // loop_header_branch
      %18 = sbr.rel (%p16) target = $region8
    $region5: #{tpu_custom_call.1} parent=1 // loop_body
      %s20 = ssub.s32 %s15, 1
      %s21 = ssub.s32 %s15, 2
      %s28 = sadd.s32 1, %s23
      %p29 = scmp.ge.s32.totalorder %s28, 1
      %s30 = scalar_select %p29, 0, %s28
      %s31 = sadd.s32 1, %s22
      %s32 = scalar_select %p29, %s31, %s22
      %p33 = scmp.ge.s32.totalorder %s32, 2
      %s34 = scalar_select %p33, 0, %s32
      %s35 = ssub.s32 %s22, %s34
      %s36 = ssub.s32 %s23, %s30
      %s37 = sor.u32 %s35, %s36
      %p38 = scmp.eq.s32.totalorder %s37, 0
      %s40 = sadd.s32 %s39, 1
      %s41 = scalar_select %p38, %s39, %s40
      %p44 = pneg %p38
      %p45 = scmp.eq.s32.totalorder %s15, 1
      %p46 = por %p44, %p45
      %p47 = scmp.ne.s32.totalorder %s39, %s42
      %p48 = scmp.eq.s32.totalorder %s15, 0
      %p49 = por %p47, %p48
      %p50 = scmp.ne.s32.totalorder %s39, %s42
      %p51 = scmp.eq.s32.totalorder %s20, 1
      %p52 = por %p50, %p51
      %p53 = scmp.ne.s32.totalorder %s42, %s43
      %p54 = scmp.eq.s32.totalorder %s20, 0
      %p55 = por %p53, %p54
      %p56 = scmp.ne.s32.totalorder %s42, %s43
      %p57 = scmp.eq.s32.totalorder %s21, 1
      %p58 = por %p56, %p57
      %p60 = scmp.ne.s32.totalorder %s43, %s59
      %p61 = scmp.eq.s32.totalorder %s21, 0
      %p62 = por %p60, %p61
      %s63 = ssub.s32 %s22, %s34
      %s64 = ssub.s32 %s23, %s30
      %s65 = sor.u32 %s63, %s64
      %p66 = scmp.eq.s32.totalorder %s65, 0
      %s68 = sadd.s32 %s67, 1
      %s69 = scalar_select %p66, %s67, %s68
      %p72 = pneg %p66
      %p73 = scmp.eq.s32.totalorder %s15, 1
      %p74 = por %p72, %p73
      %p75 = scmp.ne.s32.totalorder %s67, %s70
      %p76 = scmp.eq.s32.totalorder %s15, 0
      %p77 = por %p75, %p76
      %p78 = scmp.ne.s32.totalorder %s67, %s70
      %p79 = scmp.eq.s32.totalorder %s20, 1
      %p80 = por %p78, %p79
      %p81 = scmp.ne.s32.totalorder %s70, %s71
      %p82 = scmp.eq.s32.totalorder %s20, 0
      %p83 = por %p81, %p82
      %p84 = scmp.ne.s32.totalorder %s70, %s71
      %p85 = scmp.eq.s32.totalorder %s21, 1
      %p86 = por %p84, %p85
      %p88 = scmp.ne.s32.totalorder %s71, %s87
      %p89 = scmp.eq.s32.totalorder %s21, 0
      %p90 = por %p88, %p89
      %s92 = sadd.s32 %s91, 1
      %p95 = scmp.eq.s32.totalorder %s15, 1
      %p96 = scmp.ne.s32.totalorder %s91, %s93
      %p97 = scmp.eq.s32.totalorder %s15, 0
      %p98 = por %p96, %p97
      %p99 = scmp.ne.s32.totalorder %s91, %s93
      %p100 = scmp.eq.s32.totalorder %s20, 1
      %p101 = por %p99, %p100
      %p102 = scmp.ne.s32.totalorder %s93, %s94
      %p103 = scmp.eq.s32.totalorder %s20, 0
      %p104 = por %p102, %p103
      %p105 = scmp.ne.s32.totalorder %s93, %s94
      %p106 = scmp.eq.s32.totalorder %s21, 1
      %p107 = por %p105, %p106
      %p109 = scmp.ne.s32.totalorder %s94, %s108
      %p110 = scmp.eq.s32.totalorder %s21, 0
      %p111 = por %p109, %p110
      %s112 = ssub.s32 %s22, %s34
      %p113 = scmp.eq.s32.totalorder %s112, 0
      %s115 = sadd.s32 %s114, 1
      %s116 = scalar_select %p113, %s114, %s115
      %p119 = pneg %p113
      %p120 = scmp.eq.s32.totalorder %s15, 1
      %p121 = por %p119, %p120
      %p122 = scmp.ne.s32.totalorder %s114, %s117
      %p123 = scmp.eq.s32.totalorder %s15, 0
      %p124 = por %p122, %p123
      %p125 = scmp.ne.s32.totalorder %s114, %s117
      %p126 = scmp.eq.s32.totalorder %s20, 1
      %p127 = por %p125, %p126
      %p128 = scmp.ne.s32.totalorder %s117, %s118
      %p129 = scmp.eq.s32.totalorder %s20, 0
      %p130 = por %p128, %p129
      %p131 = scmp.ne.s32.totalorder %s117, %s118
      %p132 = scmp.eq.s32.totalorder %s21, 1
      %p133 = por %p131, %p132
      %p135 = scmp.ne.s32.totalorder %s118, %s134
      %p136 = scmp.eq.s32.totalorder %s21, 0
      %p137 = por %p135, %p136
      %p138 = scmp.le.s32.totalorder 1, %s15
      %p139 = scmp.lt.s32.totalorder %s15, 3
      %p140 = pnand %p138, %p139
      %p141 = pneg %p140
      // Predicated region
      $region9: #{tpu_custom_call.1} parent=5 // pred_check
        _
      $region10: #{tpu_custom_call.1} parent=5 // pred_check_branch
        %143 = sbr.rel (%p140) target = $region12
      $region11: #{tpu_custom_call.1} parent=5 // pred_region
        %s144 = ssub.s32 %s15, 1
        // Predicated region
        $region13: #{tpu_custom_call.1} parent=11 // pred_check
          %p145 = pneg %p104
        $region14: #{tpu_custom_call.1} parent=11 // pred_check_branch
          %147 = sbr.rel (%p145) target = $region16
        $region15: #{tpu_custom_call.1} parent=11 // pred_region
          _
        $region16: #{tpu_custom_call.1} parent=11 // pred_fallthru
          _
      $region12: #{tpu_custom_call.1} parent=5 // pred_fallthru
        _
      %p148 = scmp.lt.s32.totalorder %s15, 2
      // Predicated region
      $region17: #{tpu_custom_call.1} parent=5 // pred_check
        %p149 = pneg %p148
      $region18: #{tpu_custom_call.1} parent=5 // pred_check_branch
        %151 = sbr.rel (%p149) target = $region20
      $region19: #{tpu_custom_call.1} parent=5 // pred_region
        // Predicated region
        $region21: #{tpu_custom_call.1} parent=19 // pred_check
          %p152 = pneg %p49
        $region22: #{tpu_custom_call.1} parent=19 // pred_check_branch
          %154 = sbr.rel (%p152) target = $region24
        $region23: #{tpu_custom_call.1} parent=19 // pred_region
          %s155 = smul.u32 2, %s23
          %p156 = scmp.lt.s32.totalorder %s22, 1
          %s157 = scalar_select %p156, %s22, 1
          %p158 = scmp.lt.s32.totalorder %s155, 1
          %s159 = scalar_select %p158, %s155, 1
          %s160 = smul.addr %s157, 2
          %s161 = sadd.s32 %s159, %s160
          %s162 = smul.addr %s161, 4
          %s163 = scalar_lea.vmem %s0, %s162
          %s164 = smul.u32 2, %s23
        $region24: #{tpu_custom_call.1} parent=19 // pred_fallthru
          _
        // Predicated region
        $region25: #{tpu_custom_call.1} parent=19 // pred_check
          %p165 = pneg %p77
        $region26: #{tpu_custom_call.1} parent=19 // pred_check_branch
          %167 = sbr.rel (%p165) target = $region28
        $region27: #{tpu_custom_call.1} parent=19 // pred_region
          %s168 = sand.u32 %s67, 1
          %s169 = scalar_lea.sflag [#allocation6], %s168
          %s170 = sand.u32 %s67, 1
          %s171 = smul.addr %s170, 4
          %s172 = scalar_lea.vmem [#allocation5], %s171
          %s173 = smul.u32 2, %s23
          %175 = vsyncadd %s169, 0
          %s176 = smul.addr %s22, 2
          %s177 = sadd.s32 %s173, %s176
          %s178 = smul.addr %s177, 2
          %s179 = scalar_lea.hbm %s1, %s178
          %s181 = sshll.u32 %s179, 4
          %s182 = int_to_ptr.hbm [resolvable:$true] %s181
          %s183 = sshll.u32 %s172, 4
          %s184 = int_to_ptr.vmem [resolvable:$true] %s183
          %186 = dma.hbm_to_vmem [thread:$0]  %s182, 64, %s184, %s169
        $region28: #{tpu_custom_call.1} parent=19 // pred_fallthru
          _
      $region20: #{tpu_custom_call.1} parent=5 // pred_fallthru
        _
      %p187 = scmp.le.s32.totalorder 1, %s15
      %p188 = scmp.lt.s32.totalorder %s15, 3
      %p189 = pnand %p187, %p188
      %p190 = pneg %p189
      // Predicated region
      $region29: #{tpu_custom_call.1} parent=5 // pred_check
        _
      $region30: #{tpu_custom_call.1} parent=5 // pred_check_branch
        %192 = sbr.rel (%p189) target = $region32
      $region31: #{tpu_custom_call.1} parent=5 // pred_region
        %s193 = ssub.s32 %s15, 1
        %s194 = sand.u32 %s70, 1
        %s195 = scalar_lea.sflag [#allocation6], %s194
        %s196 = sand.u32 %s70, 1
        %s197 = smul.addr %s196, 4
        %s198 = scalar_lea.vmem [#allocation5], %s197
        // Predicated region
        $region33: #{tpu_custom_call.1} parent=31 // pred_check
          %p199 = pneg %p83
        $region34: #{tpu_custom_call.1} parent=31 // pred_check_branch
          %201 = sbr.rel (%p199) target = $region36
        $region35: #{tpu_custom_call.1} parent=31 // pred_region
          %203 = dma.done %s195, 64
        $region36: #{tpu_custom_call.1} parent=31 // pred_fallthru
          _
        %s204 = smul.u32 2, %s25
        %p205 = scmp.lt.s32.totalorder %s24, 1
        %s206 = scalar_select %p205, %s24, 1
        %p207 = scmp.lt.s32.totalorder %s204, 1
        %s208 = scalar_select %p207, %s204, 1
        %s209 = smul.addr %s206, 2
        %s210 = sadd.s32 %s208, %s209
        %s211 = smul.addr %s210, 4
        %s212 = scalar_lea.vmem %s0, %s211
        %p213 = pneg %p55
        %p214 = pneg %p52
        %s215 = sand.u32 %s70, 1
        %s216 = scalar_lea.sflag [#allocation6], %s215
        %s217 = sand.u32 %s70, 1
        %s218 = smul.addr %s217, 4
        %s219 = scalar_lea.vmem [#allocation5], %s218
        %p220 = pneg %p83
        %p221 = pneg %p80
        %p222 = pneg %p104
        %p223 = pneg %p101
        %p224 = pneg %p130
        %p225 = pneg %p127
        %s226 = sand.u32 %s117, 1
        %s227 = scalar_lea.sflag [#allocation7], %s226
        %s228 = sand.u32 %s117, 1
        %s229 = smul.addr %s228, 8
        %s230 = scalar_lea.vmem [#allocation8], %s229
        %s231 = smul.u32 2, %s25
        %p232 = scmp.lt.s32.totalorder %s24, 1
        %s233 = scalar_select %p232, %s24, 1
        %p234 = scmp.lt.s32.totalorder %s231, 1
        %s235 = scalar_select %p234, %s231, 1
        %s236 = smul.addr %s233, 2
        %s237 = sadd.s32 %s235, %s236
        %s238 = smul.addr %s237, 4
        %s239 = scalar_lea.vmem %s0, %s238
        %s240 = smul.u32 2, %s25
        %s241 = smul.u32 2, %s25
        %v242 = vld [vmem:[%s239] sm:$0xff]
        %v243 = vld [vmem:[%s198] sm:$0xf]
        %245 = vst [vmem:[#allocation1] ss:$2 sm:$0xff] %v242
        %v246 = vld.sshfl [vmem:[#allocation1] sm:$0xff pattern:$0x75316420]
        %v247 = vld.sshfl [vmem:[#allocation1 + $0x8] sm:$0xff pattern:$0x75316420]
        %250 = vst [vmem:[#allocation1] ss:$2 sm:$0xff] %v242
        %v251 = vld.sshfl [vmem:[#allocation1] sm:$0xff pattern:$0x75316420]
        %v252 = vld.sshfl [vmem:[#allocation1 + $0x8] sm:$0xff pattern:$0x75316420]
        %255 = vmatpush.xpose.msra.mxu0 0.0
        %256 = vmatpush.xpose.msra.mxu0 0.0
        %257 = vmatpush.xpose.msra.mxu0 0.0
        %258 = vmatpush.xpose.msra.mxu0 0.0
        %259 = vmatpush.xpose.msra.mxu0 0.0
        %260 = vmatpush.xpose.msra.mxu0 0.0
        %261 = vmatpush.xpose.msra.mxu0 0.0
        %262 = vmatpush.xpose.msra.mxu0 0.0
        %263 = vmatpush.xpose.msra.mxu0 0.0
        %264 = vmatpush.xpose.msra.mxu0 0.0
        %265 = vmatpush.xpose.msra.mxu0 0.0
        %266 = vmatpush.xpose.msra.mxu0 0.0
        %267 = vmatpush.xpose.msra.mxu0 0.0
        %268 = vmatpush.xpose.msra.mxu0 0.0
        %269 = vmatpush.xpose.msra.mxu0 0.0
        %270 = vmatpush.xpose.msra.mxu0 %v251
        %271 = vmatmul.f32.gmra.mxu0 %v246
        %v272 = vpop.f32.mrf.mxu0
        %v273 = vadd.f32 0.0, %v272
        %274 = vdwg.mxu0
        %275 = vmatpush.xpose.msra.mxu0 0.0
        %276 = vmatpush.xpose.msra.mxu0 0.0
        %277 = vmatpush.xpose.msra.mxu0 0.0
        %278 = vmatpush.xpose.msra.mxu0 0.0
        %279 = vmatpush.xpose.msra.mxu0 0.0
        %280 = vmatpush.xpose.msra.mxu0 0.0
        %281 = vmatpush.xpose.msra.mxu0 0.0
        %282 = vmatpush.xpose.msra.mxu0 0.0
        %283 = vmatpush.xpose.msra.mxu0 0.0
        %284 = vmatpush.xpose.msra.mxu0 0.0
        %285 = vmatpush.xpose.msra.mxu0 0.0
        %286 = vmatpush.xpose.msra.mxu0 0.0
        %287 = vmatpush.xpose.msra.mxu0 0.0
        %288 = vmatpush.xpose.msra.mxu0 0.0
        %289 = vmatpush.xpose.msra.mxu0 0.0
        %290 = vmatpush.xpose.msra.mxu0 %v252
        %291 = vmatmul.f32.gmra.mxu0 %v247
        %v292 = vpop.f32.mrf.mxu0
        %v293 = vadd.f32 %v273, %v292
        %294 = vdwg.mxu0
        %296 = vst [vmem:[#allocation1] ss:$4 sm:$0xff] %v243
        %v297 = vld.sshfl [vmem:[#allocation1] sm:$0xff pattern:$0x73625140]
        %v298 = vld.sshfl [vmem:[#allocation1 + $0x8] sm:$0xff pattern:$0x73625140]
        %301 = vst [vmem:[#allocation1] ss:$2 sm:$0xff] %v242
        %v302 = vld.sshfl [vmem:[#allocation1] sm:$0xff pattern:$0x75316420]
        %v303 = vld.sshfl [vmem:[#allocation1 + $0x8] sm:$0xff pattern:$0x75316420]
        %306 = vmatpush.xpose.msra.mxu0 0.0
        %307 = vmatpush.xpose.msra.mxu0 0.0
        %308 = vmatpush.xpose.msra.mxu0 0.0
        %309 = vmatpush.xpose.msra.mxu0 0.0
        %310 = vmatpush.xpose.msra.mxu0 0.0
        %311 = vmatpush.xpose.msra.mxu0 0.0
        %312 = vmatpush.xpose.msra.mxu0 0.0
        %313 = vmatpush.xpose.msra.mxu0 0.0
        %314 = vmatpush.xpose.msra.mxu0 0.0
        %315 = vmatpush.xpose.msra.mxu0 0.0
        %316 = vmatpush.xpose.msra.mxu0 0.0
        %317 = vmatpush.xpose.msra.mxu0 0.0
        %318 = vmatpush.xpose.msra.mxu0 0.0
        %319 = vmatpush.xpose.msra.mxu0 0.0
        %320 = vmatpush.xpose.msra.mxu0 0.0
        %321 = vmatpush.xpose.msra.mxu0 %v302
        %322 = vmatmul.f32.gmra.mxu0 %v297
        %v323 = vpop.f32.mrf.mxu0
        %v324 = vadd.f32 0.0, %v323
        %325 = vdwg.mxu0
        %326 = vmatpush.xpose.msra.mxu0 0.0
        %327 = vmatpush.xpose.msra.mxu0 0.0
        %328 = vmatpush.xpose.msra.mxu0 0.0
        %329 = vmatpush.xpose.msra.mxu0 0.0
        %330 = vmatpush.xpose.msra.mxu0 0.0
        %331 = vmatpush.xpose.msra.mxu0 0.0
        %332 = vmatpush.xpose.msra.mxu0 0.0
        %333 = vmatpush.xpose.msra.mxu0 0.0
        %334 = vmatpush.xpose.msra.mxu0 0.0
        %335 = vmatpush.xpose.msra.mxu0 0.0
        %336 = vmatpush.xpose.msra.mxu0 0.0
        %337 = vmatpush.xpose.msra.mxu0 0.0
        %338 = vmatpush.xpose.msra.mxu0 0.0
        %339 = vmatpush.xpose.msra.mxu0 0.0
        %340 = vmatpush.xpose.msra.mxu0 0.0
        %341 = vmatpush.xpose.msra.mxu0 %v303
        %342 = vmatmul.f32.gmra.mxu0 %v298
        %v343 = vpop.f32.mrf.mxu0
        %v344 = vadd.f32 %v324, %v343
        %345 = vdwg.mxu0
        %346 = vst [vmem:[#allocation1] ss:$4 sm:$0xff] %v243
        %v347 = vld.sshfl [vmem:[#allocation1] sm:$0xff pattern:$0x73625140]
        %v348 = vld.sshfl [vmem:[#allocation1 + $0x8] sm:$0xff pattern:$0x73625140]
        %351 = vst [vmem:[#allocation1] ss:$4 sm:$0xff] %v243
        %v352 = vld.sshfl [vmem:[#allocation1] sm:$0xff pattern:$0x73625140]
        %v353 = vld.sshfl [vmem:[#allocation1 + $0x8] sm:$0xff pattern:$0x73625140]
        %356 = vmatpush.xpose.msra.mxu0 0.0
        %357 = vmatpush.xpose.msra.mxu0 0.0
        %358 = vmatpush.xpose.msra.mxu0 0.0
        %359 = vmatpush.xpose.msra.mxu0 0.0
        %360 = vmatpush.xpose.msra.mxu0 0.0
        %361 = vmatpush.xpose.msra.mxu0 0.0
        %362 = vmatpush.xpose.msra.mxu0 0.0
        %363 = vmatpush.xpose.msra.mxu0 0.0
        %364 = vmatpush.xpose.msra.mxu0 0.0
        %365 = vmatpush.xpose.msra.mxu0 0.0
        %366 = vmatpush.xpose.msra.mxu0 0.0
        %367 = vmatpush.xpose.msra.mxu0 0.0
        %368 = vmatpush.xpose.msra.mxu0 0.0
        %369 = vmatpush.xpose.msra.mxu0 0.0
        %370 = vmatpush.xpose.msra.mxu0 0.0
        %371 = vmatpush.xpose.msra.mxu0 %v352
        %372 = vmatmul.f32.gmra.mxu0 %v347
        %v373 = vpop.f32.mrf.mxu0
        %v374 = vadd.f32 0.0, %v373
        %375 = vdwg.mxu0
        %376 = vmatpush.xpose.msra.mxu0 0.0
        %377 = vmatpush.xpose.msra.mxu0 0.0
        %378 = vmatpush.xpose.msra.mxu0 0.0
        %379 = vmatpush.xpose.msra.mxu0 0.0
        %380 = vmatpush.xpose.msra.mxu0 0.0
        %381 = vmatpush.xpose.msra.mxu0 0.0
        %382 = vmatpush.xpose.msra.mxu0 0.0
        %383 = vmatpush.xpose.msra.mxu0 0.0
        %384 = vmatpush.xpose.msra.mxu0 0.0
        %385 = vmatpush.xpose.msra.mxu0 0.0
        %386 = vmatpush.xpose.msra.mxu0 0.0
        %387 = vmatpush.xpose.msra.mxu0 0.0
        %388 = vmatpush.xpose.msra.mxu0 0.0
        %389 = vmatpush.xpose.msra.mxu0 0.0
        %390 = vmatpush.xpose.msra.mxu0 0.0
        %391 = vmatpush.xpose.msra.mxu0 %v353
        %392 = vmatmul.f32.gmra.mxu0 %v348
        %v393 = vpop.f32.mrf.mxu0
        %v394 = vadd.f32 %v374, %v393
        %395 = vdwg.mxu0
        %p396 = scmp.eq.s32.totalorder %s25, 0
        // Predicated region
        $region37: #{tpu_custom_call.1} parent=31 // pred_check
          %p397 = pneg %p396
        $region38: #{tpu_custom_call.1} parent=31 // pred_check_branch
          %399 = sbr.rel (%p397) target = $region40
        $region39: #{tpu_custom_call.1} parent=31 // pred_region
          %vm400 = vcmask 27648
          %401 = vst.msk [vmem:[#allocation2] sm:$0xf] %vm400, 0.0
          %vm402 = vcmask 25600
          %403 = vst.msk [vmem:[#allocation3] sm:$0x3] %vm402, 0.0
          %vm404 = vcmask 9216
          %405 = vst.msk [vmem:[#allocation4] sm:$0x3] %vm404, 0.0
        $region40: #{tpu_custom_call.1} parent=31 // pred_fallthru
          _
        %v406 = vld [vmem:[#allocation2] sm:$0xf]
        %v407 = vadd.f32 %v406, %v293
        %vm408 = vcmask 27648
        %409 = vst.msk [vmem:[#allocation2] sm:$0xf] %vm408, %v407
        %v410 = vld [vmem:[#allocation3] sm:$0x3]
        %v411 = vadd.f32 %v410, %v344
        %vm412 = vcmask 25600
        %413 = vst.msk [vmem:[#allocation3] sm:$0x3] %vm412, %v411
        %v414 = vld [vmem:[#allocation4] sm:$0x3]
        %v415 = vadd.f32 %v414, %v394
        %vm416 = vcmask 9216
        %417 = vst.msk [vmem:[#allocation4] sm:$0x3] %vm416, %v415
        // Predicated region
        $region41: #{tpu_custom_call.1} parent=31 // pred_check
          %p418 = pneg %p396
        $region42: #{tpu_custom_call.1} parent=31 // pred_check_branch
          %420 = sbr.rel (%p418) target = $region44
        $region43: #{tpu_custom_call.1} parent=31 // pred_region
          %v421 = vld [vmem:[#allocation2] sm:$0xf]
          %v422 = vld [vmem:[#allocation3] sm:$0x3]
          %v423 = vld [vmem:[#allocation4] sm:$0x3]
          %v424 = vld [vmem:[%s2] sm:$0xff]
          %v425 = vld [vmem:[%s2 + $0x8] sm:$0xff]
          %v426 = vsub.f32 1.0, %v424
          %v427 = vsub.f32 1.0, %v425
          %vm428 = vcmask 31744
          %v430 = vsel %vm428, %v424, 0
          %v433 = vsel %vm428, %v425, 0
          %vm435 = vcmask 1043456
          %v437 = vsel %vm435, %v421, 0
          %439 = vmatpush.msra.mxu0 0.0
          %440 = vmatpush.msra.mxu0 0.0
          %441 = vmatpush.msra.mxu0 0.0
          %442 = vmatpush.msra.mxu0 0.0
          %443 = vmatpush.msra.mxu0 0.0
          %444 = vmatpush.msra.mxu0 0.0
          %445 = vmatpush.msra.mxu0 0.0
          %446 = vmatpush.msra.mxu0 0.0
          %447 = vmatpush.msra.mxu0 0.0
          %448 = vmatpush.msra.mxu0 0.0
          %449 = vmatpush.msra.mxu0 0.0
          %450 = vmatpush.msra.mxu0 0.0
          %451 = vmatpush.msra.mxu0 0.0
          %452 = vmatpush.msra.mxu0 0.0
          %453 = vmatpush.msra.mxu0 0.0
          %454 = vmatpush.msra.mxu0 %v437
          %455 = vmatmul.f32.gmra.mxu0 %v430
          %v456 = vpop.f32.mrf.mxu0
          %v457 = vadd.f32 0.0, %v456
          %458 = vmatmul.f32.gmra.mxu0 %v433
          %v459 = vpop.f32.mrf.mxu0
          %v460 = vadd.f32 0.0, %v459
          %461 = vdwg.mxu0
          %v462 = vmul.f32 %v457, %v424
          %v463 = vmul.f32 %v460, %v425
          %v464 = vsel %vm428, %v462, 0.0
          %465 = vadd.xlane.f32.xlu0 %v464
          %v466 = vpop.xlane.xlu0 %465
          %v467 = vsel %vm428, %v463, 0.0
          %468 = vadd.xlane.f32.xlu0 %v467
          %v469 = vpop.xlane.xlu0 %468
          %v471 = vsel %vm428, %v426, 0
          %v474 = vsel %vm428, %v427, 0
          %476 = vmatpush.msra.mxu0 0.0
          %477 = vmatpush.msra.mxu0 0.0
          %478 = vmatpush.msra.mxu0 0.0
          %479 = vmatpush.msra.mxu0 0.0
          %480 = vmatpush.msra.mxu0 0.0
          %481 = vmatpush.msra.mxu0 0.0
          %482 = vmatpush.msra.mxu0 0.0
          %483 = vmatpush.msra.mxu0 0.0
          %484 = vmatpush.msra.mxu0 0.0
          %485 = vmatpush.msra.mxu0 0.0
          %486 = vmatpush.msra.mxu0 0.0
          %487 = vmatpush.msra.mxu0 0.0
          %488 = vmatpush.msra.mxu0 0.0
          %489 = vmatpush.msra.mxu0 0.0
          %490 = vmatpush.msra.mxu0 0.0
          %491 = vmatpush.msra.mxu0 %v437
          %492 = vmatmul.f32.gmra.mxu0 %v471
          %v493 = vpop.f32.mrf.mxu0
          %v494 = vadd.f32 0.0, %v493
          %495 = vmatmul.f32.gmra.mxu0 %v474
          %v496 = vpop.f32.mrf.mxu0
          %v497 = vadd.f32 0.0, %v496
          %498 = vdwg.mxu0
          %v499 = vmul.f32 %v494, %v426
          %v500 = vmul.f32 %v497, %v427
          %v501 = vsel %vm428, %v499, 0.0
          %502 = vadd.xlane.f32.xlu0 %v501
          %v503 = vpop.xlane.xlu0 %502
          %v504 = vsel %vm428, %v500, 0.0
          %505 = vadd.xlane.f32.xlu0 %v504
          %v506 = vpop.xlane.xlu0 %505
          %v507 = vperm.slane %v422, 0
          %v508 = vmul.f32 %v424, %v507
          %v509 = vmul.f32 %v425, %v507
          %v510 = vsel %vm428, %v508, 0.0
          %511 = vadd.xlane.f32.xlu0 %v510
          %v512 = vpop.xlane.xlu0 %511
          %v513 = vsel %vm428, %v509, 0.0
          %514 = vadd.xlane.f32.xlu0 %v513
          %v515 = vpop.xlane.xlu0 %514
          %v516 = vperm.slane %v422, 1
          %v517 = vmul.f32 %v426, %v516
          %v518 = vmul.f32 %v427, %v516
          %v519 = vsel %vm428, %v517, 0.0
          %520 = vadd.xlane.f32.xlu0 %v519
          %v521 = vpop.xlane.xlu0 %520
          %v522 = vsel %vm428, %v518, 0.0
          %523 = vadd.xlane.f32.xlu0 %v522
          %v524 = vpop.xlane.xlu0 %523
          %v525 = vmul.f32 %v512, 2.0
          %v526 = vmul.f32 %v515, 2.0
          %v527 = vperm.slane %v423, 0
          %v528 = vsub.f32 %v527, %v525
          %v529 = vsub.f32 %v527, %v526
          %v530 = vadd.f32 %v528, %v466
          %v531 = vadd.f32 %v529, %v469
          %v532 = vmax.f32 %v530, 0.0
          %v533 = vmax.f32 %v531, 0.0
          %v534 = vmul.f32 %v521, 2.0
          %v535 = vmul.f32 %v524, 2.0
          %v536 = vperm.slane %v423, 1
          %v537 = vsub.f32 %v536, %v534
          %v538 = vsub.f32 %v536, %v535
          %v539 = vadd.f32 %v537, %v503
          %v540 = vadd.f32 %v538, %v506
          %v541 = vmax.f32 %v539, 0.0
          %v542 = vmax.f32 %v540, 0.0
          %v543 = vmul.f32 %v423, 1e-06
          %v544 = vperm.slane %v543, 0
          %v545 = vadd.f32 %v532, %v544
          %v546 = vadd.f32 %v533, %v544
          %v547 = vperm.slane %v543, 1
          %v548 = vadd.f32 %v541, %v547
          %v549 = vadd.f32 %v542, %v547
          %552 = vrot.lane.b32.xlu0 %v548, 127
          %v553 = vpop.permute.xlu0 %552
          %554 = vrot.lane.b32.xlu0 %v549, 127
          %v555 = vpop.permute.xlu0 %554
          %v558 = vmul.f32 %v545, %v553
          %v559 = vmul.f32 %v546, %v555
          %vm560 = vcmask 7168
          %v561 = vsel %vm560, %v558, inf
          %v562 = vsel %vm560, %v559, inf
          %v563 = vmin.f32 %v561, %v562
          %564 = vmin.xlane.f32.xlu0 %v563
          %v565 = vpop.xlane.xlu0 %564
          %v566 = vrot.slane %v565, 4
          %v567 = vmin.f32 %v565, %v566
          %v568 = vrot.slane %v567, 2
          %v569 = vmin.f32 %v567, %v568
          %v570 = vrot.slane %v569, 1
          %v571 = vmin.f32 %v569, %v570
          %s572 = vtos %v571
          %v574 = vrot.slane %v423, 1
          %575 = vrot.lane.b32.xlu0 %v574, 127
          %v576 = vpop.permute.xlu0 %575
          %v578 = vmul.f32 %v423, %v576
          %s579 = vtos %v578
          %v580 = vstv %s572
          %v581 = vlog2.pop %v580
          %v582 = vmul.f32 %v581, 0.6931472
          %s583 = vtos %v582
          %s584 = smul.f32 %s583, 0.4342945
          %v585 = vstv %s579
          %v586 = vlog2.pop %v585
          %v587 = vmul.f32 %v586, 0.6931472
          %s588 = vtos %v587
          %s589 = smul.f32 %s588, 0.4342945
          %s590 = ssub.f32 %s584, %s589
          %s591 = smul.f32 %s590, 10.0
          %v592 = vstv %s591
          %593 = vst [vmem:[%s230] sm:$0xff] %v592
        $region44: #{tpu_custom_call.1} parent=31 // pred_fallthru
          _
        %s594 = sand.u32 %s117, 1
        %s595 = scalar_lea.sflag [#allocation7], %s594
        %s596 = sand.u32 %s117, 1
        %s597 = smul.addr %s596, 8
        %s598 = scalar_lea.vmem [#allocation8], %s597
        // Predicated region
        $region45: #{tpu_custom_call.1} parent=31 // pred_check
          %p599 = pneg %p127
        $region46: #{tpu_custom_call.1} parent=31 // pred_check_branch
          %601 = sbr.rel (%p599) target = $region48
        $region47: #{tpu_custom_call.1} parent=31 // pred_region
          %603 = vsyncadd %s595, 0
          %s604 = smul.addr %s24, 8
          %s605 = scalar_lea.hbm %s3, %s604
          %s607 = sshll.u32 %s598, 4
          %s608 = int_to_ptr.vmem [resolvable:$true] %s607
          %s609 = sshll.u32 %s605, 4
          %s610 = int_to_ptr.hbm [resolvable:$true] %s609
          %612 = dma.vmem_to_hbm [thread:$0]  %s608, 128, %s610, %s595
        $region48: #{tpu_custom_call.1} parent=31 // pred_fallthru
          _
      $region32: #{tpu_custom_call.1} parent=5 // pred_fallthru
        _
      %p613 = scmp.le.s32.totalorder 2, %s15
      // Predicated region
      $region49: #{tpu_custom_call.1} parent=5 // pred_check
        %p614 = pneg %p613
      $region50: #{tpu_custom_call.1} parent=5 // pred_check_branch
        %616 = sbr.rel (%p614) target = $region52
      $region51: #{tpu_custom_call.1} parent=5 // pred_region
        %s617 = ssub.s32 %s15, 2
        // Predicated region
        $region53: #{tpu_custom_call.1} parent=51 // pred_check
          %p618 = pneg %p133
        $region54: #{tpu_custom_call.1} parent=51 // pred_check_branch
          %620 = sbr.rel (%p618) target = $region56
        $region55: #{tpu_custom_call.1} parent=51 // pred_region
          %s621 = sand.u32 %s118, 1
          %s622 = scalar_lea.sflag [#allocation7], %s621
          %s623 = sand.u32 %s118, 1
          %s624 = smul.addr %s623, 8
          %s625 = scalar_lea.vmem [#allocation8], %s624
          %627 = dma.done %s622, 128
        $region56: #{tpu_custom_call.1} parent=51 // pred_fallthru
          _
      $region52: #{tpu_custom_call.1} parent=5 // pred_fallthru
        _
    $region6: #{tpu_custom_call.1} parent=1 // loop_footer
      %s19 = sadd.s32 1, %s15
    $region7: #{tpu_custom_call.1} parent=1 // loop_footer_branch
      %14 = sbr.rel target = $region3
    $region8: #{tpu_custom_call.1} parent=1 // loop_exit
      _
    %628 = vsyncpa [#allocation6], 1
    %s629 = scalar_lea.sflag [#allocation6], 1
    %630 = vsyncpa %s629, 1
    %631 = vsyncpa [#allocation7], 1
    %s632 = scalar_lea.sflag [#allocation7], 1
    %633 = vsyncpa %s632, 1

</llo_original>
